<compile_context>
chip_gen: v7x
topology: tpu7x:2x2x1
jax: 0.10.0
libtpu: 0.0.40
codegen_flags: <defaults>
</compile_context>

<pallas_src>
import functools

import jax
import jax.numpy as jnp
from jax.experimental import pallas as pl
from jax.experimental.pallas import tpu as pltpu


def _round_up(x, m):
    return (x + m - 1) // m * m


def apan_kernel(neg_samples, x_ref, vec_ref, w_src_ref, w_dst_ref,
                b_out_ref, out_ref):
    """LayerNorm + EdgePredictor on one edge block, fully inside VMEM.

    x_ref:     [2+neg, TE, D]   rows: src | pos_dst | neg_dst_0 ..
    vec_ref:   [5, D]           rows: ln_w | ln_b | b_src | b_dst | w_out
    w_src_ref: [D, D]           w_dst_ref: [D, D]
    b_out_ref: [1]  (SMEM)
    out_ref:   [1+neg, TE]      row 0 = pos scores, rows 1.. = neg scores
    """
    x = x_ref[...].astype(jnp.float32)              # (SEG, TE, D)
    vec = vec_ref[...]
    ln_w, ln_b, b_src, b_dst, w_out = vec[0], vec[1], vec[2], vec[3], vec[4]

    # ---- IdentityNormLayer == LayerNorm(D), eps = 1e-5, over the true D ----
    mean = jnp.mean(x, axis=-1, keepdims=True)
    cent = x - mean
    var = jnp.mean(cent * cent, axis=-1, keepdims=True)
    hn = cent * jax.lax.rsqrt(var + 1e-5) * ln_w + ln_b   # (SEG, TE, D)

    # ---- EdgePredictor front-end: split matmuls (no discarded columns) ----
    w_src_m = w_src_ref[...]
    w_dst_m = w_dst_ref[...]
    h_src = jnp.dot(hn[0], w_src_m,
                    preferred_element_type=jnp.float32) + b_src     # (TE, D)
    b_out = b_out_ref[0]

    for j in range(1 + neg_samples):        # j = 0 -> pos, j >= 1 -> neg block
        h_dst = jnp.dot(hn[1 + j], w_dst_m,
                        preferred_element_type=jnp.float32) + b_dst
        edge = jnp.maximum(h_src + h_dst, 0.0)
        # 1-column out-projection: VPU multiply + lane reduction (keeps MXU
        # free); result is lane-dense over the edge dimension.
        out_ref[j, :] = jnp.sum(edge * w_out, axis=-1) + b_out


def apan_forward(h, params, neg_samples=1, tile_e=1024):
    """Launch a gridded pallas_call; no wrapper-side HBM copies of activations."""
    N, D = h.shape
    assert N % (neg_samples + 2) == 0, "rows must split evenly into src|pos|neg"
    E = N // (neg_samples + 2)
    SEG = 2 + neg_samples
    f32 = jnp.float32

    # Activations: pure reshape (free bitcast) -- no pad, no astype, no HBM copy.
    x = h.reshape(SEG, E, D)

    # Tiny params: fold the five D-length vectors into ONE resident VMEM block.
    vec_pack = jnp.concatenate(
        [params['ln_w'].reshape(1, D), params['ln_b'].reshape(1, D),
         params['b_src'].reshape(1, D), params['b_dst'].reshape(1, D),
         params['w_out'].reshape(1, D)], axis=0).astype(f32)          # (5, D)
    w_src = params['w_src'].astype(f32)                               # (D, D)
    w_dst = params['w_dst'].astype(f32)
    b_out = params['b_out'].reshape(1).astype(f32)                    # SMEM scalar

    # ---- edge-tile selection ----
    if E <= tile_e:
        # Single full-extent block: full dims need no (8,128) alignment and no
        # padding.  (On v7x with modest E this leaves one TC idle -- acceptable
        # for small problems.)
        TE = E
    else:
        # Multiple of 128 (lane-dense output block, bf16-safe sublanes) and
        # capped so the grid has at least 2 blocks (feeds both v7x TCs).
        TE = max(128, min(_round_up(tile_e, 128),
                          _round_up(pl.cdiv(E, 2), 128)))
    grid = (pl.cdiv(E, TE),)
    # Partial last block: OOB input rows are garbage (per-row math only, so they
    # never contaminate valid rows) and OOB output writes are masked.

    kernel = functools.partial(apan_kernel, neg_samples)
    resident = lambda i: (0, 0)

    out = pl.pallas_call(
        kernel,
        out_shape=jax.ShapeDtypeStruct((1 + neg_samples, E), f32),
        grid=grid,
        in_specs=[
            pl.BlockSpec((SEG, TE, D), lambda i: (0, i, 0)),   # activations
            pl.BlockSpec((5, D), resident),                    # packed vectors
            pl.BlockSpec((D, D), resident),                    # w_src
            pl.BlockSpec((D, D), resident),                    # w_dst
            pl.BlockSpec(memory_space=pltpu.MemorySpace.SMEM), # b_out scalar
        ],
        out_specs=pl.BlockSpec((1 + neg_samples, TE), lambda i: (0, i)),
        compiler_params=pltpu.CompilerParams(
            dimension_semantics=("parallel",),
            vmem_limit_bytes=48 * 1024 * 1024),
    )(x, vec_pack, w_src, w_dst, b_out)

    pos_out = out[0].reshape(E, 1)
    neg_out = out[1:].reshape(neg_samples * E, 1)
    return pos_out, neg_out


def apan_reference(h, params, neg_samples=1):
    """Pure-JAX reference mirroring the PyTorch module semantics."""
    N, D = h.shape
    E = N // (neg_samples + 2)
    mean = jnp.mean(h, axis=-1, keepdims=True)
    var = jnp.mean((h - mean) ** 2, axis=-1, keepdims=True)
    hn = (h - mean) / jnp.sqrt(var + 1e-5) * params['ln_w'] + params['ln_b']
    h_src = hn[:E] @ params['w_src'] + params['b_src']
    h_pos = hn[E:2 * E] @ params['w_dst'] + params['b_dst']
    h_neg = hn[2 * E:] @ params['w_dst'] + params['b_dst']
    pos_edge = jax.nn.relu(h_src + h_pos)
    neg_edge = jax.nn.relu(jnp.tile(h_src, (neg_samples, 1)) + h_neg)
    return (pos_edge @ params['w_out'] + params['b_out'],
            neg_edge @ params['w_out'] + params['b_out'])


if __name__ == "__main__":
    dim_memory = 100   # APAN default dim_memory (= EdgePredictor dim_in, LN dim)
    key = jax.random.PRNGKey(0)
    keys = jax.random.split(key, 16)

    params = dict(
        # LayerNorm affine params (torch init: weight=1, bias=0)
        ln_w=jnp.ones((1, dim_memory), jnp.float32),
        ln_b=jnp.zeros((1, dim_memory), jnp.float32),
        # EdgePredictor linears, deterministic synthetic init
        w_src=0.1 * jax.random.normal(keys[1], (dim_memory, dim_memory), jnp.float32),
        b_src=0.1 * jax.random.normal(keys[2], (1, dim_memory), jnp.float32),
        w_dst=0.1 * jax.random.normal(keys[3], (dim_memory, dim_memory), jnp.float32),
        b_dst=0.1 * jax.random.normal(keys[4], (1, dim_memory), jnp.float32),
        w_out=0.1 * jax.random.normal(keys[5], (dim_memory, 1), jnp.float32),
        b_out=0.1 * jax.random.normal(keys[6], (1, 1), jnp.float32),
    )

    # case 1: neg_samples=1, E=8  (single full-extent block)
    neg1, E1 = 1, 8
    h1 = jax.random.normal(keys[7], (E1 * (neg1 + 2), dim_memory), jnp.float32)
    pos1, negs1 = apan_forward(h1, params, neg1)
    jax.block_until_ready((pos1, negs1))
    rp1, rn1 = apan_reference(h1, params, neg1)
    assert pos1.shape == (E1, 1) and negs1.shape == (neg1 * E1, 1)
    assert jnp.allclose(pos1, rp1, atol=1e-4, rtol=1e-4)
    assert jnp.allclose(negs1, rn1, atol=1e-4, rtol=1e-4)

    # case 2: neg_samples=2, E=12 (odd sizes, still single full-extent block)
    neg2, E2 = 2, 12
    h2 = jax.random.normal(keys[8], (E2 * (neg2 + 2), dim_memory), jnp.float32)
    pos2, negs2 = apan_forward(h2, params, neg2)
    jax.block_until_ready((pos2, negs2))
    rp2, rn2 = apan_reference(h2, params, neg2)
    assert pos2.shape == (E2, 1) and negs2.shape == (neg2 * E2, 1)
    assert jnp.allclose(pos2, rp2, atol=1e-4, rtol=1e-4)
    assert jnp.allclose(negs2, rn2, atol=1e-4, rtol=1e-4)

    # case 3: neg_samples=1, E=200 with a small tile -> exercises the gridded
    # path (grid=2) with a masked partial last block.
    neg3, E3 = 1, 200
    h3 = jax.random.normal(keys[9], (E3 * (neg3 + 2), dim_memory), jnp.float32)
    pos3, negs3 = apan_forward(h3, params, neg3, tile_e=128)
    jax.block_until_ready((pos3, negs3))
    rp3, rn3 = apan_reference(h3, params, neg3)
    assert pos3.shape == (E3, 1) and negs3.shape == (neg3 * E3, 1)
    assert jnp.allclose(pos3, rp3, atol=1e-4, rtol=1e-4)
    assert jnp.allclose(negs3, rn3, atol=1e-4, rtol=1e-4)

    print("KERNEL_OK")
</pallas_src>

<mosaic_0001>
module attributes {stable_mosaic.version = 11 : i64} {
  func.func @apan_kernel(%arg0: i32, %arg1: memref<3x8x100xf32, #tpu.memory_space<vmem>>, %arg2: memref<5x100xf32, #tpu.memory_space<vmem>>, %arg3: memref<100x100xf32, #tpu.memory_space<vmem>>, %arg4: memref<100x100xf32, #tpu.memory_space<vmem>>, %arg5: memref<1xf32, #tpu.memory_space<smem>>, %arg6: memref<2x8xf32, #tpu.memory_space<vmem>>) attributes {dimension_semantics = [#tpu.dimension_semantics<parallel>], iteration_bounds = array<i64: 1>, scalar_prefetch = 0 : i64, scratch_operands = 0 : i64, tpu.core_type = #tpu.core_type<tc>, window_params = [{transform_indices = @transform_0, window_bounds = array<i64: 3, 8, 100>}, {pipeline_mode = #tpu.pipeline_mode<synchronous>, transform_indices = @transform_1, window_bounds = array<i64: 5, 100>}, {pipeline_mode = #tpu.pipeline_mode<synchronous>, transform_indices = @transform_2, window_bounds = array<i64: 100, 100>}, {pipeline_mode = #tpu.pipeline_mode<synchronous>, transform_indices = @transform_3, window_bounds = array<i64: 100, 100>}, {transform_indices = @transform_4, window_bounds = array<i64: 1>}, {transform_indices = @transform_5, window_bounds = array<i64: 2, 8>}]} {
    %c0 = arith.constant 0 : index
    %c0_0 = arith.constant 0 : index
    %c0_1 = arith.constant 0 : index
    %0 = vector.load %arg1[%c0, %c0_0, %c0_1] : memref<3x8x100xf32, #tpu.memory_space<vmem>>, vector<3x8x100xf32>
    %c0_2 = arith.constant 0 : index
    %c0_3 = arith.constant 0 : index
    %1 = vector.load %arg2[%c0_2, %c0_3] : memref<5x100xf32, #tpu.memory_space<vmem>>, vector<5x100xf32>
    %2 = vector.extract_strided_slice %1 {offsets = [0, 0], sizes = [1, 100], strides = [1, 1]} : vector<5x100xf32> to vector<1x100xf32>
    %3 = vector.shape_cast %2 : vector<1x100xf32> to vector<100xf32>
    %4 = vector.extract_strided_slice %1 {offsets = [1, 0], sizes = [1, 100], strides = [1, 1]} : vector<5x100xf32> to vector<1x100xf32>
    %5 = vector.shape_cast %4 : vector<1x100xf32> to vector<100xf32>
    %6 = vector.extract_strided_slice %1 {offsets = [2, 0], sizes = [1, 100], strides = [1, 1]} : vector<5x100xf32> to vector<1x100xf32>
    %7 = vector.shape_cast %6 : vector<1x100xf32> to vector<100xf32>
    %8 = vector.extract_strided_slice %1 {offsets = [3, 0], sizes = [1, 100], strides = [1, 1]} : vector<5x100xf32> to vector<1x100xf32>
    %9 = vector.shape_cast %8 : vector<1x100xf32> to vector<100xf32>
    %10 = vector.extract_strided_slice %1 {offsets = [4, 0], sizes = [1, 100], strides = [1, 1]} : vector<5x100xf32> to vector<1x100xf32>
    %11 = vector.shape_cast %10 : vector<1x100xf32> to vector<100xf32>
    %cst = arith.constant dense<0.000000e+00> : vector<3x8xf32>
    %12 = vector.multi_reduction <add>, %0, %cst [2] : vector<3x8x100xf32> to vector<3x8xf32>
    %13 = vector.shape_cast %12 : vector<3x8xf32> to vector<3x8x1xf32>
    %cst_4 = arith.constant 1.000000e+02 : f32
    %14 = vector.broadcast %cst_4 : f32 to vector<3x8x1xf32>
    %15 = arith.divf %13, %14 : vector<3x8x1xf32>
    %16 = vector.broadcast %15 : vector<3x8x1xf32> to vector<3x8x100xf32>
    %17 = arith.subf %0, %16 : vector<3x8x100xf32>
    %18 = arith.mulf %17, %17 : vector<3x8x100xf32>
    %cst_5 = arith.constant dense<0.000000e+00> : vector<3x8xf32>
    %19 = vector.multi_reduction <add>, %18, %cst_5 [2] : vector<3x8x100xf32> to vector<3x8xf32>
    %20 = vector.shape_cast %19 : vector<3x8xf32> to vector<3x8x1xf32>
    %cst_6 = arith.constant 1.000000e+02 : f32
    %21 = vector.broadcast %cst_6 : f32 to vector<3x8x1xf32>
    %22 = arith.divf %20, %21 : vector<3x8x1xf32>
    %cst_7 = arith.constant 9.99999974E-6 : f32
    %23 = vector.broadcast %cst_7 : f32 to vector<3x8x1xf32>
    %24 = arith.addf %22, %23 : vector<3x8x1xf32>
    %25 = math.rsqrt %24 : vector<3x8x1xf32>
    %26 = vector.broadcast %25 : vector<3x8x1xf32> to vector<3x8x100xf32>
    %27 = arith.mulf %17, %26 : vector<3x8x100xf32>
    %28 = vector.shape_cast %3 : vector<100xf32> to vector<1x1x100xf32>
    %29 = vector.broadcast %28 : vector<1x1x100xf32> to vector<3x8x100xf32>
    %30 = arith.mulf %27, %29 : vector<3x8x100xf32>
    %31 = vector.shape_cast %5 : vector<100xf32> to vector<1x1x100xf32>
    %32 = vector.broadcast %31 : vector<1x1x100xf32> to vector<3x8x100xf32>
    %33 = arith.addf %30, %32 : vector<3x8x100xf32>
    %c0_8 = arith.constant 0 : index
    %c0_9 = arith.constant 0 : index
    %34 = vector.load %arg3[%c0_8, %c0_9] : memref<100x100xf32, #tpu.memory_space<vmem>>, vector<100x100xf32>
    %c0_10 = arith.constant 0 : index
    %c0_11 = arith.constant 0 : index
    %35 = vector.load %arg4[%c0_10, %c0_11] : memref<100x100xf32, #tpu.memory_space<vmem>>, vector<100x100xf32>
    %36 = vector.extract_strided_slice %33 {offsets = [0, 0, 0], sizes = [1, 8, 100], strides = [1, 1, 1]} : vector<3x8x100xf32> to vector<1x8x100xf32>
    %37 = vector.shape_cast %36 : vector<1x8x100xf32> to vector<8x100xf32>
    %cst_12 = arith.constant dense<0.000000e+00> : vector<8x100xf32>
    %38 = tpu.matmul %37, %34, %cst_12 {dimension_numbers = #tpu.dot_dimension_numbers<[1], [0], [0], [1], [0, 0, 1, 1], [], []>} : vector<8x100xf32>, vector<100x100xf32>, vector<8x100xf32> -> vector<8x100xf32>
    %39 = vector.shape_cast %7 : vector<100xf32> to vector<1x100xf32>
    %40 = vector.broadcast %39 : vector<1x100xf32> to vector<8x100xf32>
    %41 = arith.addf %38, %40 : vector<8x100xf32>
    %c0_13 = arith.constant 0 : index
    %42 = memref.load %arg5[%c0_13] : memref<1xf32, #tpu.memory_space<smem>>
    %43 = vector.extract_strided_slice %33 {offsets = [1, 0, 0], sizes = [1, 8, 100], strides = [1, 1, 1]} : vector<3x8x100xf32> to vector<1x8x100xf32>
    %44 = vector.shape_cast %43 : vector<1x8x100xf32> to vector<8x100xf32>
    %cst_14 = arith.constant dense<0.000000e+00> : vector<8x100xf32>
    %45 = tpu.matmul %44, %35, %cst_14 {dimension_numbers = #tpu.dot_dimension_numbers<[1], [0], [0], [1], [0, 0, 1, 1], [], []>} : vector<8x100xf32>, vector<100x100xf32>, vector<8x100xf32> -> vector<8x100xf32>
    %46 = vector.shape_cast %9 : vector<100xf32> to vector<1x100xf32>
    %47 = vector.broadcast %46 : vector<1x100xf32> to vector<8x100xf32>
    %48 = arith.addf %45, %47 : vector<8x100xf32>
    %49 = arith.addf %41, %48 : vector<8x100xf32>
    %cst_15 = arith.constant 0.000000e+00 : f32
    %50 = vector.broadcast %cst_15 : f32 to vector<8x100xf32>
    %51 = arith.maximumf %49, %50 : vector<8x100xf32>
    %52 = vector.shape_cast %11 : vector<100xf32> to vector<1x100xf32>
    %53 = vector.broadcast %52 : vector<1x100xf32> to vector<8x100xf32>
    %54 = arith.mulf %51, %53 : vector<8x100xf32>
    %cst_16 = arith.constant dense<0.000000e+00> : vector<8xf32>
    %55 = vector.multi_reduction <add>, %54, %cst_16 [1] : vector<8x100xf32> to vector<8xf32>
    %56 = vector.broadcast %42 : f32 to vector<8xf32>
    %57 = arith.addf %55, %56 : vector<8xf32>
    %c0_17 = arith.constant 0 : index
    %c0_18 = arith.constant 0 : index
    %58 = vector.load %arg6[%c0_17, %c0_18] : memref<2x8xf32, #tpu.memory_space<vmem>>, vector<1x8xf32>
    %59 = vector.shape_cast %58 : vector<1x8xf32> to vector<8xf32>
    %60 = vector.shape_cast %57 : vector<8xf32> to vector<1x8xf32>
    tpu.vector_store %arg6[%c0_17, %c0_18], %60 {strides = array<i32>} : memref<2x8xf32, #tpu.memory_space<vmem>>, vector<1x8xf32>,
    %61 = vector.extract_strided_slice %33 {offsets = [2, 0, 0], sizes = [1, 8, 100], strides = [1, 1, 1]} : vector<3x8x100xf32> to vector<1x8x100xf32>
    %62 = vector.shape_cast %61 : vector<1x8x100xf32> to vector<8x100xf32>
    %cst_19 = arith.constant dense<0.000000e+00> : vector<8x100xf32>
    %63 = tpu.matmul %62, %35, %cst_19 {dimension_numbers = #tpu.dot_dimension_numbers<[1], [0], [0], [1], [0, 0, 1, 1], [], []>} : vector<8x100xf32>, vector<100x100xf32>, vector<8x100xf32> -> vector<8x100xf32>
    %64 = vector.shape_cast %9 : vector<100xf32> to vector<1x100xf32>
    %65 = vector.broadcast %64 : vector<1x100xf32> to vector<8x100xf32>
    %66 = arith.addf %63, %65 : vector<8x100xf32>
    %67 = arith.addf %41, %66 : vector<8x100xf32>
    %cst_20 = arith.constant 0.000000e+00 : f32
    %68 = vector.broadcast %cst_20 : f32 to vector<8x100xf32>
    %69 = arith.maximumf %67, %68 : vector<8x100xf32>
    %70 = vector.shape_cast %11 : vector<100xf32> to vector<1x100xf32>
    %71 = vector.broadcast %70 : vector<1x100xf32> to vector<8x100xf32>
    %72 = arith.mulf %69, %71 : vector<8x100xf32>
    %cst_21 = arith.constant dense<0.000000e+00> : vector<8xf32>
    %73 = vector.multi_reduction <add>, %72, %cst_21 [1] : vector<8x100xf32> to vector<8xf32>
    %74 = vector.broadcast %42 : f32 to vector<8xf32>
    %75 = arith.addf %73, %74 : vector<8xf32>
    %c1 = arith.constant 1 : index
    %c0_22 = arith.constant 0 : index
    %76 = vector.load %arg6[%c1, %c0_22] : memref<2x8xf32, #tpu.memory_space<vmem>>, vector<1x8xf32>
    %77 = vector.shape_cast %76 : vector<1x8xf32> to vector<8xf32>
    %78 = vector.shape_cast %75 : vector<8xf32> to vector<1x8xf32>
    tpu.vector_store %arg6[%c1, %c0_22], %78 {strides = array<i32>} : memref<2x8xf32, #tpu.memory_space<vmem>>, vector<1x8xf32>,
    return
  }
  func.func @transform_0(%arg0: i32) -> (i32, i32, i32) {
    %c0_i32 = arith.constant 0 : i32
    %c0_i32_0 = arith.constant 0 : i32
    %c0_i32_1 = arith.constant 0 : i32
    return %c0_i32, %arg0, %c0_i32_0 : i32, i32, i32
  }
  func.func @transform_1(%arg0: i32) -> (i32, i32) {
    %c0_i32 = arith.constant 0 : i32
    %c0_i32_0 = arith.constant 0 : i32
    %c0_i32_1 = arith.constant 0 : i32
    return %c0_i32, %c0_i32_0 : i32, i32
  }
  func.func @transform_2(%arg0: i32) -> (i32, i32) {
    %c0_i32 = arith.constant 0 : i32
    %c0_i32_0 = arith.constant 0 : i32
    %c0_i32_1 = arith.constant 0 : i32
    return %c0_i32, %c0_i32_0 : i32, i32
  }
  func.func @transform_3(%arg0: i32) -> (i32, i32) {
    %c0_i32 = arith.constant 0 : i32
    %c0_i32_0 = arith.constant 0 : i32
    %c0_i32_1 = arith.constant 0 : i32
    return %c0_i32, %c0_i32_0 : i32, i32
  }
  func.func @transform_4(%arg0: i32) -> i32 {
    %c0_i32 = arith.constant 0 : i32
    %c0_i32_0 = arith.constant 0 : i32
    return %c0_i32 : i32
  }
  func.func @transform_5(%arg0: i32) -> (i32, i32) {
    %c0_i32 = arith.constant 0 : i32
    %c0_i32_0 = arith.constant 0 : i32
    return %c0_i32, %arg0 : i32, i32
  }
}

</mosaic_0001>

<llo_original>
// kernel: tpu_custom_call.1
$region0: #{tpu_custom_call.1}
  #allocation0 [shape = 'u32[]', space=smem, size = 0x4, offset = 0x4, fixed_abs, tag = 'smem constant byte address 0x4 - core index']
  #allocation1 [shape = 'u32[144,128]{1,0:T(1,128)}', space=vmem, size = 0x12000, scoped, tag = 'internal scratch']
  #allocation2 [shape = 'f32[1]{0:T(128)S(6)}', space=smem, size = 0x200, scoped, tag = 'scoped memory for tpu_custom_call.1']
  %s0 = inlined_call_operand.hbm [shape: f32[3,8,100], index: 0, kind: input, shape index: {}]
  %s1 = inlined_call_operand.hbm [shape: f32[5,100], index: 1, kind: input, shape index: {}]
  %s2 = inlined_call_operand.hbm [shape: f32[100,100], index: 2, kind: input, shape index: {}]
  %s3 = inlined_call_operand.hbm [shape: f32[100,100], index: 3, kind: input, shape index: {}]
  %s4 = inlined_call_operand.<no memory space> [shape: f32[1], index: 4, kind: input, shape index: {}]
  %s5 = inlined_call_operand.hbm [shape: f32[2,8], index: 5, kind: output, shape index: {}]
  %s6 = sld [smem:[#allocation0]]
  $region46: #{tpu_custom_call.1} parent=0
    _
  %s8 = ssub.s32 1, %s6
  %s9 = scalar_select 0, %s8, %s6
  %10 = sst [smem:[#allocation2]] %s4
  $region1: #{tpu_custom_call.1} parent=0
    #allocation3 [shape = 'u8[12288]{0}', space=vmem, size = 0x3000, scoped, tag = 'input window, operand 0, single buffered']
    #allocation4 [shape = 's32[1]{0}', space=sflag, size = 0x4, scoped, tag = 'scoped memory for tpu_custom_call.1']
    #allocation5 [shape = 's32[1]{0}', space=sflag, size = 0x4, scoped, tag = 'scoped memory for tpu_custom_call.1']
    #allocation6 [shape = 'u8[4096]{0}', space=vmem, size = 0x1000, scoped, tag = 'input window, operand 1, single buffered']
    #allocation7 [shape = 's32[1]{0}', space=sflag, size = 0x4, scoped, tag = 'scoped memory for tpu_custom_call.1']
    #allocation8 [shape = 'u8[53248]{0}', space=vmem, size = 0xd000, scoped, tag = 'input window, operand 2, single buffered']
    #allocation9 [shape = 'u8[53248]{0}', space=vmem, size = 0xd000, scoped, tag = 'input window, operand 3, single buffered']
    #allocation10 [shape = 's32[1]{0}', space=sflag, size = 0x4, scoped, tag = 'scoped memory for tpu_custom_call.1']
    #allocation11 [shape = 'u8[1024]{0}', space=vmem, size = 0x400, scoped, tag = 'output window, operand 0, single buffered']
    %11 = vsyncpa [#allocation4], 0
    %12 = vsyncpa [#allocation7], 0
    %13 = vsyncpa [#allocation10], 0
    %14 = vsyncpa [#allocation5], 0
    // Predicated region
    $region2: #{tpu_custom_call.1} parent=1 // pred_check
      _
    $region3: #{tpu_custom_call.1} parent=1 // pred_check_branch
      %16 = sbr.rel (0) target = $region5
    $region4: #{tpu_custom_call.1} parent=1 // pred_region
      %s18 = ssub.s32 384, 384
      %19 = vsyncadd [#allocation4], %s18
      %s20 = sshll.u32 [#allocation3], 4
      %s21 = int_to_ptr.vmem [resolvable:$true] %s20
      %26 = dma.hbm_to_vmem [thread:$0]  %s0, 384, %s21, [#allocation4], 128, 128, 8
    $region5: #{tpu_custom_call.1} parent=1 // pred_fallthru
      _
    // Predicated region
    $region6: #{tpu_custom_call.1} parent=1 // pred_check
      _
    $region7: #{tpu_custom_call.1} parent=1 // pred_check_branch
      %28 = sbr.rel (0) target = $region9
    $region8: #{tpu_custom_call.1} parent=1 // pred_region
      %s30 = ssub.s32 128, 128
      %31 = vsyncadd [#allocation7], %s30
      %s33 = sshll.u32 [#allocation6], 4
      %s34 = int_to_ptr.vmem [resolvable:$true] %s33
      %36 = dma.hbm_to_vmem [thread:$0]  %s1, 128, %s34, [#allocation7]
    $region9: #{tpu_custom_call.1} parent=1 // pred_fallthru
      _
    // Predicated region
    $region10: #{tpu_custom_call.1} parent=1 // pred_check
      _
    $region11: #{tpu_custom_call.1} parent=1 // pred_check_branch
      %38 = sbr.rel (0) target = $region13
    $region12: #{tpu_custom_call.1} parent=1 // pred_region
      %s40 = ssub.s32 1664, 1664
      %41 = vsyncadd [#allocation7], %s40
      %s42 = sshll.u32 [#allocation8], 4
      %s43 = int_to_ptr.vmem [resolvable:$true] %s42
      %48 = dma.hbm_to_vmem [thread:$0]  %s2, 1664, %s43, [#allocation7], 128, 128, 8
    $region13: #{tpu_custom_call.1} parent=1 // pred_fallthru
      _
    // Predicated region
    $region14: #{tpu_custom_call.1} parent=1 // pred_check
      _
    $region15: #{tpu_custom_call.1} parent=1 // pred_check_branch
      %50 = sbr.rel (0) target = $region17
    $region16: #{tpu_custom_call.1} parent=1 // pred_region
      %s52 = ssub.s32 1664, 1664
      %53 = vsyncadd [#allocation10], %s52
      %s54 = sshll.u32 [#allocation9], 4
      %s55 = int_to_ptr.vmem [resolvable:$true] %s54
      %60 = dma.hbm_to_vmem [thread:$0]  %s3, 1664, %s55, [#allocation10], 128, 128, 8
    $region17: #{tpu_custom_call.1} parent=1 // pred_fallthru
      _
    // Predicated region
    $region18: #{tpu_custom_call.1} parent=1 // pred_check
      _
    $region19: #{tpu_custom_call.1} parent=1 // pred_check_branch
      %62 = sbr.rel (0) target = $region21
    $region20: #{tpu_custom_call.1} parent=1 // pred_region
      _
    $region21: #{tpu_custom_call.1} parent=1 // pred_fallthru
      _
    // Predicated region
    $region22: #{tpu_custom_call.1} parent=1 // pred_check
      _
    $region23: #{tpu_custom_call.1} parent=1 // pred_check_branch
      %64 = sbr.rel (0) target = $region25
    $region24: #{tpu_custom_call.1} parent=1 // pred_region
      %65 = dma.done [#allocation4], 384
    $region25: #{tpu_custom_call.1} parent=1 // pred_fallthru
      _
    // Predicated region
    $region26: #{tpu_custom_call.1} parent=1 // pred_check
      _
    $region27: #{tpu_custom_call.1} parent=1 // pred_check_branch
      %67 = sbr.rel (0) target = $region29
    $region28: #{tpu_custom_call.1} parent=1 // pred_region
      %68 = dma.done [#allocation7], 128
    $region29: #{tpu_custom_call.1} parent=1 // pred_fallthru
      _
    // Predicated region
    $region30: #{tpu_custom_call.1} parent=1 // pred_check
      _
    $region31: #{tpu_custom_call.1} parent=1 // pred_check_branch
      %70 = sbr.rel (0) target = $region33
    $region32: #{tpu_custom_call.1} parent=1 // pred_region
      %71 = dma.done [#allocation7], 1664
    $region33: #{tpu_custom_call.1} parent=1 // pred_fallthru
      _
    // Predicated region
    $region34: #{tpu_custom_call.1} parent=1 // pred_check
      _
    $region35: #{tpu_custom_call.1} parent=1 // pred_check_branch
      %73 = sbr.rel (0) target = $region37
    $region36: #{tpu_custom_call.1} parent=1 // pred_region
      %74 = dma.done [#allocation10], 1664
    $region37: #{tpu_custom_call.1} parent=1 // pred_fallthru
      _
    %v75 = vld [vmem:[#allocation3] sm:$0xff]
    %v76 = vld [vmem:[#allocation3 + $0x8] sm:$0xff]
    %v77 = vld [vmem:[#allocation3 + $0x10] sm:$0xff]
    %v78 = vld [vmem:[#allocation6] sm:$0x1f]
    %vm79 = vcmask 818176
    %v80 = vsel %vm79, %v75, 0.0
    %81 = vadd.xlane.f32.xlu0 %v80
    %v82 = vpop.xlane.xlu0 %81
    %v83 = vsel %vm79, %v76, 0.0
    %84 = vadd.xlane.f32.xlu0 %v83
    %v85 = vpop.xlane.xlu0 %84
    %v86 = vsel %vm79, %v77, 0.0
    %87 = vadd.xlane.f32.xlu0 %v86
    %v88 = vpop.xlane.xlu0 %87
    %v89 = vrcp.pop 100.0
    %v90 = vmul.f32 %v82, %v89
    %v91 = vmul.f32 %v85, %v89
    %v92 = vmul.f32 %v88, %v89
    %v93 = vsub.f32 %v75, %v90
    %v94 = vsub.f32 %v76, %v91
    %v95 = vsub.f32 %v77, %v92
    %v96 = vmul.f32 %v93, %v93
    %v97 = vmul.f32 %v94, %v94
    %v98 = vmul.f32 %v95, %v95
    %v99 = vsel %vm79, %v96, 0.0
    %100 = vadd.xlane.f32.xlu0 %v99
    %v101 = vpop.xlane.xlu0 %100
    %v102 = vsel %vm79, %v97, 0.0
    %103 = vadd.xlane.f32.xlu0 %v102
    %v104 = vpop.xlane.xlu0 %103
    %v105 = vsel %vm79, %v98, 0.0
    %106 = vadd.xlane.f32.xlu0 %v105
    %v107 = vpop.xlane.xlu0 %106
    %v108 = vmul.f32 %v101, %v89
    %v109 = vmul.f32 %v104, %v89
    %v110 = vmul.f32 %v107, %v89
    %v111 = vadd.f32 %v108, 1e-05
    %v112 = vadd.f32 %v109, 1e-05
    %v113 = vadd.f32 %v110, 1e-05
    %v114 = vrsqrt.pop %v111
    %v115 = vrsqrt.pop %v112
    %v116 = vrsqrt.pop %v113
    %v117 = vmul.f32 %v93, %v114
    %v118 = vmul.f32 %v94, %v115
    %v119 = vmul.f32 %v95, %v116
    %v120 = vlaneseq
    %v121 = vshrl.u32 %v120, 7
    %v122 = vsub.s32 0, %v121
    %v123 = vrot.slane %v78, %v122
    %v124 = vmul.f32 %v117, %v123
    %v125 = vmul.f32 %v118, %v123
    %v126 = vmul.f32 %v119, %v123
    %v127 = vlaneseq
    %v128 = vshrl.u32 %v127, 7
    %v129 = vsub.s32 1, %v128
    %v130 = vrot.slane %v78, %v129
    %v131 = vadd.f32 %v124, %v130
    %v132 = vadd.f32 %v125, %v130
    %v133 = vadd.f32 %v126, %v130
    %v134 = vld [vmem:[#allocation8] sm:$0xff]
    %v135 = vld [vmem:[#allocation8 + $0x8] sm:$0xff]
    %v136 = vld [vmem:[#allocation8 + $0x10] sm:$0xff]
    %v137 = vld [vmem:[#allocation8 + $0x18] sm:$0xff]
    %v138 = vld [vmem:[#allocation8 + $0x20] sm:$0xff]
    %v139 = vld [vmem:[#allocation8 + $0x28] sm:$0xff]
    %v140 = vld [vmem:[#allocation8 + $0x30] sm:$0xff]
    %v141 = vld [vmem:[#allocation8 + $0x38] sm:$0xff]
    %v142 = vld [vmem:[#allocation8 + $0x40] sm:$0xff]
    %v143 = vld [vmem:[#allocation8 + $0x48] sm:$0xff]
    %v144 = vld [vmem:[#allocation8 + $0x50] sm:$0xff]
    %v145 = vld [vmem:[#allocation8 + $0x58] sm:$0xff]
    %v146 = vld [vmem:[#allocation8 + $0x60] sm:$0xf]
    %v147 = vld [vmem:[#allocation9] sm:$0xff]
    %v148 = vld [vmem:[#allocation9 + $0x8] sm:$0xff]
    %v149 = vld [vmem:[#allocation9 + $0x10] sm:$0xff]
    %v150 = vld [vmem:[#allocation9 + $0x18] sm:$0xff]
    %v151 = vld [vmem:[#allocation9 + $0x20] sm:$0xff]
    %v152 = vld [vmem:[#allocation9 + $0x28] sm:$0xff]
    %v153 = vld [vmem:[#allocation9 + $0x30] sm:$0xff]
    %v154 = vld [vmem:[#allocation9 + $0x38] sm:$0xff]
    %v155 = vld [vmem:[#allocation9 + $0x40] sm:$0xff]
    %v156 = vld [vmem:[#allocation9 + $0x48] sm:$0xff]
    %v157 = vld [vmem:[#allocation9 + $0x50] sm:$0xff]
    %v158 = vld [vmem:[#allocation9 + $0x58] sm:$0xff]
    %v159 = vld [vmem:[#allocation9 + $0x60] sm:$0xf]
    %v160 = vlaneseq
    %v161 = vshrl.u32 %v160, 7
    %v162 = vsub.s32 2, %v161
    %v163 = vrot.slane %v78, %v162
    %v165 = vsel %vm79, %v131, 0
    %vm167 = vcmask 1043456
    %v169 = vsel %vm167, %v146, 0
    %171 = vmatprep.subr.mxu0 0.0
    %172 = vmatpush1.msra.mxu0 %v134
    %173 = vmatprep.subr.mxu0 0.0
    %174 = vmatpush1.msra.mxu0 %v135
    %175 = vmatprep.subr.mxu0 0.0
    %176 = vmatpush1.msra.mxu0 %v136
    %177 = vmatprep.subr.mxu0 0.0
    %178 = vmatpush1.msra.mxu0 %v137
    %179 = vmatprep.subr.mxu0 0.0
    %180 = vmatpush1.msra.mxu0 %v138
    %181 = vmatprep.subr.mxu0 0.0
    %182 = vmatpush1.msra.mxu0 %v139
    %183 = vmatprep.subr.mxu0 0.0
    %184 = vmatpush1.msra.mxu0 %v140
    %185 = vmatprep.subr.mxu0 0.0
    %186 = vmatpush1.msra.mxu0 %v141
    %187 = vmatprep.subr.mxu0 0.0
    %188 = vmatpush1.msra.mxu0 %v142
    %189 = vmatprep.subr.mxu0 0.0
    %190 = vmatpush1.msra.mxu0 %v143
    %191 = vmatprep.subr.mxu0 0.0
    %192 = vmatpush1.msra.mxu0 %v144
    %193 = vmatprep.subr.mxu0 0.0
    %194 = vmatpush1.msra.mxu0 %v145
    %195 = vmatprep.subr.mxu0 0.0
    %196 = vmatpush1.msra.mxu0 %v169
    %197 = vmatprep.subr.mxu0 0.0
    %198 = vmatpush1.msra.mxu0 0.0
    %199 = vmatprep.subr.mxu0 0.0
    %200 = vmatpush1.msra.mxu0 0.0
    %201 = vmatprep.subr.mxu0 0.0
    %202 = vmatpush1.msra.mxu0 0.0
    %203 = vmatprep.subr.mxu0 0.0
    %204 = vmatpush1.msra.mxu0 0.0
    %205 = vmatprep.subr.mxu0 0.0
    %206 = vmatpush1.msra.mxu0 0.0
    %207 = vmatprep.subr.mxu0 0.0
    %208 = vmatpush1.msra.mxu0 0.0
    %209 = vmatprep.subr.mxu0 0.0
    %210 = vmatpush1.msra.mxu0 0.0
    %211 = vmatprep.subr.mxu0 0.0
    %212 = vmatpush1.msra.mxu0 0.0
    %213 = vmatprep.subr.mxu0 0.0
    %214 = vmatpush1.msra.mxu0 0.0
    %215 = vmatprep.subr.mxu0 0.0
    %216 = vmatpush1.msra.mxu0 0.0
    %217 = vmatprep.subr.mxu0 0.0
    %218 = vmatpush1.msra.mxu0 0.0
    %219 = vmatprep.subr.mxu0 0.0
    %220 = vmatpush1.msra.mxu0 0.0
    %221 = vmatprep.subr.mxu0 0.0
    %222 = vmatpush1.msra.mxu0 0.0
    %223 = vmatprep.subr.mxu0 0.0
    %224 = vmatpush1.msra.mxu0 0.0
    %225 = vmatprep.subr.mxu0 0.0
    %226 = vmatpush1.msra.mxu0 0.0
    %227 = vmatprep.subr.mxu0 0.0
    %228 = vmatpush1.msra.mxu0 0.0
    %229 = vmatprep.subr.mxu0 0.0
    %230 = vmatpush1.msra.mxu0 0.0
    %231 = vmatprep.subr.mxu0 0.0
    %232 = vmatpush1.msra.mxu0 0.0
    %233 = vmatprep.subr.mxu0 0.0
    %234 = vmatpush1.msra.mxu0 0.0
    %235 = vmatprep.mubr.f32.mxu0 0.0
    %236 = vmatmul.mubr.f32.gmra.mrb[0].mxu0 %v165
    %v237 = vpop.f32.mrb[0].mxu0
    %v238 = vadd.f32 %v163, %v237
    %v239 = vpop.f32.mrb[0].mxu0
    %240 = vdwg.mxu0
    %s241 = sld [smem:[#allocation2]]
    %v242 = vlaneseq
    %v243 = vshrl.u32 %v242, 7
    %v244 = vsub.s32 3, %v243
    %v245 = vrot.slane %v78, %v244
    %v247 = vsel %vm79, %v132, 0
    %v250 = vsel %vm167, %v159, 0
    %252 = vmatprep.subr.mxu0 0.0
    %253 = vmatpush1.msra.mxu0 %v147
    %254 = vmatprep.subr.mxu0 0.0
    %255 = vmatpush1.msra.mxu0 %v148
    %256 = vmatprep.subr.mxu0 0.0
    %257 = vmatpush1.msra.mxu0 %v149
    %258 = vmatprep.subr.mxu0 0.0
    %259 = vmatpush1.msra.mxu0 %v150
    %260 = vmatprep.subr.mxu0 0.0
    %261 = vmatpush1.msra.mxu0 %v151
    %262 = vmatprep.subr.mxu0 0.0
    %263 = vmatpush1.msra.mxu0 %v152
    %264 = vmatprep.subr.mxu0 0.0
    %265 = vmatpush1.msra.mxu0 %v153
    %266 = vmatprep.subr.mxu0 0.0
    %267 = vmatpush1.msra.mxu0 %v154
    %268 = vmatprep.subr.mxu0 0.0
    %269 = vmatpush1.msra.mxu0 %v155
    %270 = vmatprep.subr.mxu0 0.0
    %271 = vmatpush1.msra.mxu0 %v156
    %272 = vmatprep.subr.mxu0 0.0
    %273 = vmatpush1.msra.mxu0 %v157
    %274 = vmatprep.subr.mxu0 0.0
    %275 = vmatpush1.msra.mxu0 %v158
    %276 = vmatprep.subr.mxu0 0.0
    %277 = vmatpush1.msra.mxu0 %v250
    %278 = vmatprep.subr.mxu0 0.0
    %279 = vmatpush1.msra.mxu0 0.0
    %280 = vmatprep.subr.mxu0 0.0
    %281 = vmatpush1.msra.mxu0 0.0
    %282 = vmatprep.subr.mxu0 0.0
    %283 = vmatpush1.msra.mxu0 0.0
    %284 = vmatprep.subr.mxu0 0.0
    %285 = vmatpush1.msra.mxu0 0.0
    %286 = vmatprep.subr.mxu0 0.0
    %287 = vmatpush1.msra.mxu0 0.0
    %288 = vmatprep.subr.mxu0 0.0
    %289 = vmatpush1.msra.mxu0 0.0
    %290 = vmatprep.subr.mxu0 0.0
    %291 = vmatpush1.msra.mxu0 0.0
    %292 = vmatprep.subr.mxu0 0.0
    %293 = vmatpush1.msra.mxu0 0.0
    %294 = vmatprep.subr.mxu0 0.0
    %295 = vmatpush1.msra.mxu0 0.0
    %296 = vmatprep.subr.mxu0 0.0
    %297 = vmatpush1.msra.mxu0 0.0
    %298 = vmatprep.subr.mxu0 0.0
    %299 = vmatpush1.msra.mxu0 0.0
    %300 = vmatprep.subr.mxu0 0.0
    %301 = vmatpush1.msra.mxu0 0.0
    %302 = vmatprep.subr.mxu0 0.0
    %303 = vmatpush1.msra.mxu0 0.0
    %304 = vmatprep.subr.mxu0 0.0
    %305 = vmatpush1.msra.mxu0 0.0
    %306 = vmatprep.subr.mxu0 0.0
    %307 = vmatpush1.msra.mxu0 0.0
    %308 = vmatprep.subr.mxu0 0.0
    %309 = vmatpush1.msra.mxu0 0.0
    %310 = vmatprep.subr.mxu0 0.0
    %311 = vmatpush1.msra.mxu0 0.0
    %312 = vmatprep.subr.mxu0 0.0
    %313 = vmatpush1.msra.mxu0 0.0
    %314 = vmatprep.subr.mxu0 0.0
    %315 = vmatpush1.msra.mxu0 0.0
    %316 = vmatprep.mubr.f32.mxu0 0.0
    %317 = vmatmul.mubr.f32.gmra.mrb[0].mxu0 %v247
    %v318 = vpop.f32.mrb[0].mxu0
    %v319 = vadd.f32 %v245, %v318
    %v320 = vpop.f32.mrb[0].mxu0
    %321 = vdwg.mxu0
    %v322 = vadd.f32 %v238, %v319
    %v323 = vmax.f32 %v322, 0.0
    %v324 = vlaneseq
    %v325 = vshrl.u32 %v324, 7
    %v326 = vsub.s32 4, %v325
    %v327 = vrot.slane %v78, %v326
    %v328 = vmul.f32 %v323, %v327
    %v329 = vsel %vm79, %v328, 0.0
    %330 = vadd.xlane.f32.xlu0 %v329
    %v331 = vpop.xlane.xlu0 %330
    %v332 = vstv %s241
    %v333 = vadd.f32 %v331, %v332
    %v335 = vlaneseq
    %v336 = vand.u32 %v335, 127
    %v337 = vlaneseq
    %v338 = vshrl.u32 %v337, 7
    %v339 = vsub.s32 %v336, %v338
    %v340 = vrot.slane %v333, %v339
    %vm342 = vcmask 57344
    %343 = vst.msk [vmem:[#allocation11] sm:$0x1] %vm342, %v340
    %v345 = vsel %vm79, %v133, 0
    %347 = vmatprep.subr.mxu0 0.0
    %348 = vmatpush1.msra.mxu0 %v147
    %349 = vmatprep.subr.mxu0 0.0
    %350 = vmatpush1.msra.mxu0 %v148
    %351 = vmatprep.subr.mxu0 0.0
    %352 = vmatpush1.msra.mxu0 %v149
    %353 = vmatprep.subr.mxu0 0.0
    %354 = vmatpush1.msra.mxu0 %v150
    %355 = vmatprep.subr.mxu0 0.0
    %356 = vmatpush1.msra.mxu0 %v151
    %357 = vmatprep.subr.mxu0 0.0
    %358 = vmatpush1.msra.mxu0 %v152
    %359 = vmatprep.subr.mxu0 0.0
    %360 = vmatpush1.msra.mxu0 %v153
    %361 = vmatprep.subr.mxu0 0.0
    %362 = vmatpush1.msra.mxu0 %v154
    %363 = vmatprep.subr.mxu0 0.0
    %364 = vmatpush1.msra.mxu0 %v155
    %365 = vmatprep.subr.mxu0 0.0
    %366 = vmatpush1.msra.mxu0 %v156
    %367 = vmatprep.subr.mxu0 0.0
    %368 = vmatpush1.msra.mxu0 %v157
    %369 = vmatprep.subr.mxu0 0.0
    %370 = vmatpush1.msra.mxu0 %v158
    %371 = vmatprep.subr.mxu0 0.0
    %372 = vmatpush1.msra.mxu0 %v250
    %373 = vmatprep.subr.mxu0 0.0
    %374 = vmatpush1.msra.mxu0 0.0
    %375 = vmatprep.subr.mxu0 0.0
    %376 = vmatpush1.msra.mxu0 0.0
    %377 = vmatprep.subr.mxu0 0.0
    %378 = vmatpush1.msra.mxu0 0.0
    %379 = vmatprep.subr.mxu0 0.0
    %380 = vmatpush1.msra.mxu0 0.0
    %381 = vmatprep.subr.mxu0 0.0
    %382 = vmatpush1.msra.mxu0 0.0
    %383 = vmatprep.subr.mxu0 0.0
    %384 = vmatpush1.msra.mxu0 0.0
    %385 = vmatprep.subr.mxu0 0.0
    %386 = vmatpush1.msra.mxu0 0.0
    %387 = vmatprep.subr.mxu0 0.0
    %388 = vmatpush1.msra.mxu0 0.0
    %389 = vmatprep.subr.mxu0 0.0
    %390 = vmatpush1.msra.mxu0 0.0
    %391 = vmatprep.subr.mxu0 0.0
    %392 = vmatpush1.msra.mxu0 0.0
    %393 = vmatprep.subr.mxu0 0.0
    %394 = vmatpush1.msra.mxu0 0.0
    %395 = vmatprep.subr.mxu0 0.0
    %396 = vmatpush1.msra.mxu0 0.0
    %397 = vmatprep.subr.mxu0 0.0
    %398 = vmatpush1.msra.mxu0 0.0
    %399 = vmatprep.subr.mxu0 0.0
    %400 = vmatpush1.msra.mxu0 0.0
    %401 = vmatprep.subr.mxu0 0.0
    %402 = vmatpush1.msra.mxu0 0.0
    %403 = vmatprep.subr.mxu0 0.0
    %404 = vmatpush1.msra.mxu0 0.0
    %405 = vmatprep.subr.mxu0 0.0
    %406 = vmatpush1.msra.mxu0 0.0
    %407 = vmatprep.subr.mxu0 0.0
    %408 = vmatpush1.msra.mxu0 0.0
    %409 = vmatprep.subr.mxu0 0.0
    %410 = vmatpush1.msra.mxu0 0.0
    %411 = vmatprep.mubr.f32.mxu0 0.0
    %412 = vmatmul.mubr.f32.gmra.mrb[0].mxu0 %v345
    %v413 = vpop.f32.mrb[0].mxu0
    %v414 = vadd.f32 %v245, %v413
    %v415 = vpop.f32.mrb[0].mxu0
    %416 = vdwg.mxu0
    %v417 = vadd.f32 %v238, %v414
    %v418 = vmax.f32 %v417, 0.0
    %v419 = vmul.f32 %v418, %v327
    %v420 = vsel %vm79, %v419, 0.0
    %421 = vadd.xlane.f32.xlu0 %v420
    %v422 = vpop.xlane.xlu0 %421
    %v423 = vadd.f32 %v422, %v332
    %v425 = vlaneseq
    %v426 = vshrl.u32 %v425, 7
    %v427 = vsub.s32 %v336, %v426
    %v428 = vrot.slane %v423, %v427
    %430 = vst.msk [vmem:[#allocation11 + $0x1] sm:$0x1] %vm342, %v428
    // Predicated region
    $region38: #{tpu_custom_call.1} parent=1 // pred_check
      _
    $region39: #{tpu_custom_call.1} parent=1 // pred_check_branch
      %432 = sbr.rel (0) target = $region41
    $region40: #{tpu_custom_call.1} parent=1 // pred_region
      %s434 = ssub.s32 32, 32
      %435 = vsyncadd [#allocation5], %s434
      %s437 = sshll.u32 [#allocation11], 4
      %s438 = int_to_ptr.vmem [resolvable:$true] %s437
      %440 = dma.vmem_to_hbm [thread:$0]  %s438, 32, %s5, [#allocation5]
    $region41: #{tpu_custom_call.1} parent=1 // pred_fallthru
      _
    // Predicated region
    $region42: #{tpu_custom_call.1} parent=1 // pred_check
      _
    $region43: #{tpu_custom_call.1} parent=1 // pred_check_branch
      %442 = sbr.rel (0) target = $region45
    $region44: #{tpu_custom_call.1} parent=1 // pred_region
      %443 = dma.done [#allocation5], 32
    $region45: #{tpu_custom_call.1} parent=1 // pred_fallthru
      _
    %444 = vsyncpa [#allocation4], 1
    %445 = vsyncpa [#allocation7], 1
    %446 = vsyncpa [#allocation10], 1
    %447 = vsyncpa [#allocation5], 1

</llo_original>
